<compile_context>
chip_gen: v7x
topology: tpu7x:2x2x1
jax: 0.10.0
libtpu: 0.0.40
codegen_flags: <defaults>
</compile_context>

<pallas_src>
import jax
import jax.numpy as jnp
from jax.experimental import pallas as pl
from jax.experimental.pallas import tpu as pltpu


def adsorption_net_kernel(x_ref, w1_ref, b1_ref, w2_ref, b2_ref,
                          w3_ref, b3_ref, w4_ref, b4_ref, o_ref):
    """One batch tile; activations carried in transposed (features, B_TILE) layout."""
    x = x_ref[...].astype(jnp.float32)        # (4, B_TILE)  elementwise stays f32 (v5e-safe)
    w1 = w1_ref[...]                          # (64, 4)   f32
    w2 = w2_ref[...]                          # (64, 64)  bf16 (default) or f32 MXU operand
    w3 = w3_ref[...]                          # (64, 64)
    wdt = w2.dtype

    # layer1 + ReLU: K=4, so run it on the VPU as 4 broadcasted multiply-adds
    # ((64,1) lane-broadcast x (1,B_TILE) sublane-broadcast) instead of a degenerate
    # K=4 MXU matmul; VALU slots have slack under the MXU-bound 64x64 layers.
    h = b1_ref[...] + w1[:, 0:1] * x[0:1, :]
    h = h + w1[:, 1:2] * x[1:2, :]
    h = h + w1[:, 2:3] * x[2:3, :]
    h = h + w1[:, 3:4] * x[3:4, :]
    h = jnp.maximum(h, 0.0)
    # TODO(synk): nn.Dropout(p=0.1) is identity here (eval/inference semantics only).

    # layer2 + ReLU: reduced-precision MXU operands, f32 accumulation, f32 elementwise.
    h = jnp.dot(w2, h.astype(wdt), preferred_element_type=jnp.float32) + b2_ref[...]
    h = jnp.maximum(h, 0.0)

    # layer3 + ReLU
    h = jnp.dot(w3, h.astype(wdt), preferred_element_type=jnp.float32) + b3_ref[...]
    h = jnp.maximum(h, 0.0)

    # output layer (64 -> 1): VPU multiply + cross-sublane (XLU) reduce instead of an
    # M=1 MXU matmul; the (1, B_TILE) result is lane-dense -> unmasked store.
    y = jnp.sum(h * w4_ref[...], axis=0, keepdims=True) + b4_ref[...]   # (1, B_TILE)
    o_ref[...] = y.astype(o_ref.dtype)


def _round_up(n, m):
    return ((n + m - 1) // m) * m


def adsorption_net_forward(x, params, *, b_tile=8192, use_bf16=True):
    """x: (B, 4) float32. params: PyTorch-layout weights w_i (out, in), biases b_i (out,).

    Returns (B, 1) float32, matching AdsorptionNet.forward in eval mode.
    bf16 mode quantizes the 64x64 weights and streamed activations (eval-quality only).
    """
    B, F = x.shape
    assert F == 4, "AdsorptionNet expects 4 input features"

    wdt = jnp.bfloat16 if use_bf16 else jnp.float32

    # Only the MXU-bound 64x64 layers (and the streamed x) use the reduced dtype;
    # layer 1 (VPU), the 64->1 output layer and all biases stay f32.
    w1 = params["w1"].astype(jnp.float32)                  # (64, 4)
    w2 = params["w2"].astype(wdt)                          # (64, 64)
    w3 = params["w3"].astype(wdt)                          # (64, 64)
    w4 = params["w4"].T.astype(jnp.float32)                # (1, 64) -> (64, 1)
    b1 = params["b1"].reshape(-1, 1).astype(jnp.float32)   # (64, 1)
    b2 = params["b2"].reshape(-1, 1).astype(jnp.float32)   # (64, 1)
    b3 = params["b3"].reshape(-1, 1).astype(jnp.float32)   # (64, 1)
    b4 = params["b4"].reshape(1, 1).astype(jnp.float32)    # (1, 1)

    # Batch-tile selection: multiple of 128 (lane width), big enough to amortize the
    # ~0.35us per-grid-step cost, clamped so small batches don't compute mostly padding
    # and so num_tiles >= 2 whenever B > 128 (megacore sharding of the parallel axis on v7x).
    b_cap = _round_up(max(pl.cdiv(B, 2), 1), 128)
    b_tile = max(128, min(_round_up(b_tile, 128), b_cap))
    num_tiles = pl.cdiv(B, b_tile)

    # Single fused transpose + cast (no separate jnp.pad pass; Pallas masks the ragged
    # final tile).  Puts the batch dimension on the 128-lane minor axis.
    xt = x.T.astype(wdt)                                   # (4, B)

    def resident(shape):
        # Constant block index -> weights/biases stay VMEM-resident across grid steps.
        return pl.BlockSpec(shape, lambda i: (0, 0))

    out = pl.pallas_call(
        adsorption_net_kernel,
        out_shape=jax.ShapeDtypeStruct((1, B), jnp.float32),
        grid=(num_tiles,),
        in_specs=[
            pl.BlockSpec((4, b_tile), lambda i: (0, i)),   # streamed x tile
            resident((64, 4)), resident((64, 1)),          # w1, b1
            resident((64, 64)), resident((64, 1)),         # w2, b2
            resident((64, 64)), resident((64, 1)),         # w3, b3
            resident((64, 1)), resident((1, 1)),           # w4 (transposed), b4
        ],
        out_specs=pl.BlockSpec((1, b_tile), lambda i: (0, i)),  # lane-dense store
        compiler_params=pltpu.CompilerParams(
            dimension_semantics=("parallel",),
            vmem_limit_bytes=32 * 1024 * 1024),
    )(xt, w1, b1, w2, b2, w3, b3, w4, b4)                  # (1, B)

    return out.T                                           # (B, 1)


def init_params(key):
    """PyTorch nn.Linear-style init: W (out, in), b (out,), uniform +/- 1/sqrt(fan_in)."""
    dims = [(4, 64), (64, 64), (64, 64), (64, 1)]
    params = {}
    for i, (fan_in, fan_out) in enumerate(dims, start=1):
        key, kw, kb = jax.random.split(key, 3)
        bound = 1.0 / float(fan_in) ** 0.5
        params[f"w{i}"] = jax.random.uniform(
            kw, (fan_out, fan_in), jnp.float32, -bound, bound)
        params[f"b{i}"] = jax.random.uniform(
            kb, (fan_out,), jnp.float32, -bound, bound)
    return params


def reference_forward(x, params):
    """Pure-JAX reference (PyTorch layout: y = x @ W.T + b)."""
    h = jnp.maximum(x @ params["w1"].T + params["b1"], 0.0)
    h = jnp.maximum(h @ params["w2"].T + params["b2"], 0.0)
    h = jnp.maximum(h @ params["w3"].T + params["b3"], 0.0)
    return h @ params["w4"].T + params["b4"]


if __name__ == "__main__":
    root = jax.random.PRNGKey(0)
    kparams, kx1, kx2 = jax.random.split(root, 3)
    params = init_params(kparams)

    # Case 1: tiny batch (B=8) -> single partial 128-lane tile, default bf16 MXU path.
    x1 = jax.random.normal(kx1, (8, 4), jnp.float32)
    out1 = adsorption_net_forward(x1, params)
    jax.block_until_ready(out1)
    ref1 = reference_forward(x1, params)
    assert out1.shape == (8, 1)
    assert jnp.allclose(out1, ref1, atol=5e-2, rtol=5e-2)

    # Case 2: multi-step grid with a ragged final tile (B=300 -> 2 tiles of 256), bf16.
    x2 = jax.random.normal(kx2, (300, 4), jnp.float32)
    out2 = adsorption_net_forward(x2, params)
    jax.block_until_ready(out2)
    ref2 = reference_forward(x2, params)
    assert out2.shape == (300, 1)
    assert jnp.allclose(out2, ref2, atol=5e-2, rtol=5e-2)

    # Case 3: full-f32 path (use_bf16=False) for tight numerical validation of the structure.
    out3 = adsorption_net_forward(x2, params, use_bf16=False)
    jax.block_until_ready(out3)
    assert out3.shape == (300, 1)
    assert jnp.allclose(out3, ref2, atol=1e-4, rtol=1e-4)

    print("KERNEL_OK")
</pallas_src>

<mosaic_0001>
module attributes {stable_mosaic.version = 11 : i64} {
  func.func @adsorption_net_kernel(%arg0: i32, %arg1: memref<4x128xbf16, #tpu.memory_space<vmem>>, %arg2: memref<64x4xf32, #tpu.memory_space<vmem>>, %arg3: memref<64x1xf32, #tpu.memory_space<vmem>>, %arg4: memref<64x64xbf16, #tpu.memory_space<vmem>>, %arg5: memref<64x1xf32, #tpu.memory_space<vmem>>, %arg6: memref<64x64xbf16, #tpu.memory_space<vmem>>, %arg7: memref<64x1xf32, #tpu.memory_space<vmem>>, %arg8: memref<64x1xf32, #tpu.memory_space<vmem>>, %arg9: memref<1x1xf32, #tpu.memory_space<vmem>>, %arg10: memref<1x128xf32, #tpu.memory_space<vmem>>) attributes {dimension_semantics = [#tpu.dimension_semantics<parallel>], iteration_bounds = array<i64: 1>, scalar_prefetch = 0 : i64, scratch_operands = 0 : i64, tpu.core_type = #tpu.core_type<tc>, window_params = [{transform_indices = @transform_0, window_bounds = array<i64: 4, 128>}, {pipeline_mode = #tpu.pipeline_mode<synchronous>, transform_indices = @transform_1, window_bounds = array<i64: 64, 4>}, {pipeline_mode = #tpu.pipeline_mode<synchronous>, transform_indices = @transform_2, window_bounds = array<i64: 64, 1>}, {pipeline_mode = #tpu.pipeline_mode<synchronous>, transform_indices = @transform_3, window_bounds = array<i64: 64, 64>}, {pipeline_mode = #tpu.pipeline_mode<synchronous>, transform_indices = @transform_4, window_bounds = array<i64: 64, 1>}, {pipeline_mode = #tpu.pipeline_mode<synchronous>, transform_indices = @transform_5, window_bounds = array<i64: 64, 64>}, {pipeline_mode = #tpu.pipeline_mode<synchronous>, transform_indices = @transform_6, window_bounds = array<i64: 64, 1>}, {pipeline_mode = #tpu.pipeline_mode<synchronous>, transform_indices = @transform_7, window_bounds = array<i64: 64, 1>}, {pipeline_mode = #tpu.pipeline_mode<synchronous>, transform_indices = @transform_8, window_bounds = array<i64: 1, 1>}, {transform_indices = @transform_9, window_bounds = array<i64: 1, 128>}]} {
    %c0 = arith.constant 0 : index
    %c0_0 = arith.constant 0 : index
    %0 = vector.load %arg1[%c0, %c0_0] : memref<4x128xbf16, #tpu.memory_space<vmem>>, vector<4x128xbf16>
    %1 = arith.extf %0 : vector<4x128xbf16> to vector<4x128xf32>
    %c0_1 = arith.constant 0 : index
    %c0_2 = arith.constant 0 : index
    %2 = vector.load %arg2[%c0_1, %c0_2] : memref<64x4xf32, #tpu.memory_space<vmem>>, vector<64x4xf32>
    %c0_3 = arith.constant 0 : index
    %c0_4 = arith.constant 0 : index
    %3 = vector.load %arg4[%c0_3, %c0_4] : memref<64x64xbf16, #tpu.memory_space<vmem>>, vector<64x64xbf16>
    %c0_5 = arith.constant 0 : index
    %c0_6 = arith.constant 0 : index
    %4 = vector.load %arg6[%c0_5, %c0_6] : memref<64x64xbf16, #tpu.memory_space<vmem>>, vector<64x64xbf16>
    %c0_7 = arith.constant 0 : index
    %c0_8 = arith.constant 0 : index
    %5 = vector.load %arg3[%c0_7, %c0_8] : memref<64x1xf32, #tpu.memory_space<vmem>>, vector<64x1xf32>
    %6 = vector.extract_strided_slice %2 {offsets = [0, 0], sizes = [64, 1], strides = [1, 1]} : vector<64x4xf32> to vector<64x1xf32>
    %7 = vector.extract_strided_slice %1 {offsets = [0, 0], sizes = [1, 128], strides = [1, 1]} : vector<4x128xf32> to vector<1x128xf32>
    %8 = vector.broadcast %6 : vector<64x1xf32> to vector<64x128xf32>
    %9 = vector.broadcast %7 : vector<1x128xf32> to vector<64x128xf32>
    %10 = arith.mulf %8, %9 : vector<64x128xf32>
    %11 = vector.broadcast %5 : vector<64x1xf32> to vector<64x128xf32>
    %12 = arith.addf %11, %10 : vector<64x128xf32>
    %13 = vector.extract_strided_slice %2 {offsets = [0, 1], sizes = [64, 1], strides = [1, 1]} : vector<64x4xf32> to vector<64x1xf32>
    %14 = vector.extract_strided_slice %1 {offsets = [1, 0], sizes = [1, 128], strides = [1, 1]} : vector<4x128xf32> to vector<1x128xf32>
    %15 = vector.broadcast %13 : vector<64x1xf32> to vector<64x128xf32>
    %16 = vector.broadcast %14 : vector<1x128xf32> to vector<64x128xf32>
    %17 = arith.mulf %15, %16 : vector<64x128xf32>
    %18 = arith.addf %12, %17 : vector<64x128xf32>
    %19 = vector.extract_strided_slice %2 {offsets = [0, 2], sizes = [64, 1], strides = [1, 1]} : vector<64x4xf32> to vector<64x1xf32>
    %20 = vector.extract_strided_slice %1 {offsets = [2, 0], sizes = [1, 128], strides = [1, 1]} : vector<4x128xf32> to vector<1x128xf32>
    %21 = vector.broadcast %19 : vector<64x1xf32> to vector<64x128xf32>
    %22 = vector.broadcast %20 : vector<1x128xf32> to vector<64x128xf32>
    %23 = arith.mulf %21, %22 : vector<64x128xf32>
    %24 = arith.addf %18, %23 : vector<64x128xf32>
    %25 = vector.extract_strided_slice %2 {offsets = [0, 3], sizes = [64, 1], strides = [1, 1]} : vector<64x4xf32> to vector<64x1xf32>
    %26 = vector.extract_strided_slice %1 {offsets = [3, 0], sizes = [1, 128], strides = [1, 1]} : vector<4x128xf32> to vector<1x128xf32>
    %27 = vector.broadcast %25 : vector<64x1xf32> to vector<64x128xf32>
    %28 = vector.broadcast %26 : vector<1x128xf32> to vector<64x128xf32>
    %29 = arith.mulf %27, %28 : vector<64x128xf32>
    %30 = arith.addf %24, %29 : vector<64x128xf32>
    %cst = arith.constant 0.000000e+00 : f32
    %31 = vector.broadcast %cst : f32 to vector<64x128xf32>
    %32 = arith.maximumf %30, %31 : vector<64x128xf32>
    %33 = arith.truncf %32 : vector<64x128xf32> to vector<64x128xbf16>
    %cst_9 = arith.constant dense<0.000000e+00> : vector<64x128xf32>
    %34 = tpu.matmul %3, %33, %cst_9 {dimension_numbers = #tpu.dot_dimension_numbers<[1], [0], [0], [1], [0, 0, 1, 1], [], []>} : vector<64x64xbf16>, vector<64x128xbf16>, vector<64x128xf32> -> vector<64x128xf32>
    %c0_10 = arith.constant 0 : index
    %c0_11 = arith.constant 0 : index
    %35 = vector.load %arg5[%c0_10, %c0_11] : memref<64x1xf32, #tpu.memory_space<vmem>>, vector<64x1xf32>
    %36 = vector.broadcast %35 : vector<64x1xf32> to vector<64x128xf32>
    %37 = arith.addf %34, %36 : vector<64x128xf32>
    %cst_12 = arith.constant 0.000000e+00 : f32
    %38 = vector.broadcast %cst_12 : f32 to vector<64x128xf32>
    %39 = arith.maximumf %37, %38 : vector<64x128xf32>
    %40 = arith.truncf %39 : vector<64x128xf32> to vector<64x128xbf16>
    %cst_13 = arith.constant dense<0.000000e+00> : vector<64x128xf32>
    %41 = tpu.matmul %4, %40, %cst_13 {dimension_numbers = #tpu.dot_dimension_numbers<[1], [0], [0], [1], [0, 0, 1, 1], [], []>} : vector<64x64xbf16>, vector<64x128xbf16>, vector<64x128xf32> -> vector<64x128xf32>
    %c0_14 = arith.constant 0 : index
    %c0_15 = arith.constant 0 : index
    %42 = vector.load %arg7[%c0_14, %c0_15] : memref<64x1xf32, #tpu.memory_space<vmem>>, vector<64x1xf32>
    %43 = vector.broadcast %42 : vector<64x1xf32> to vector<64x128xf32>
    %44 = arith.addf %41, %43 : vector<64x128xf32>
    %cst_16 = arith.constant 0.000000e+00 : f32
    %45 = vector.broadcast %cst_16 : f32 to vector<64x128xf32>
    %46 = arith.maximumf %44, %45 : vector<64x128xf32>
    %c0_17 = arith.constant 0 : index
    %c0_18 = arith.constant 0 : index
    %47 = vector.load %arg8[%c0_17, %c0_18] : memref<64x1xf32, #tpu.memory_space<vmem>>, vector<64x1xf32>
    %48 = vector.broadcast %47 : vector<64x1xf32> to vector<64x128xf32>
    %49 = arith.mulf %46, %48 : vector<64x128xf32>
    %cst_19 = arith.constant dense<0.000000e+00> : vector<128xf32>
    %50 = vector.multi_reduction <add>, %49, %cst_19 [0] : vector<64x128xf32> to vector<128xf32>
    %51 = vector.shape_cast %50 : vector<128xf32> to vector<1x128xf32>
    %c0_20 = arith.constant 0 : index
    %c0_21 = arith.constant 0 : index
    %52 = vector.load %arg9[%c0_20, %c0_21] : memref<1x1xf32, #tpu.memory_space<vmem>>, vector<1x1xf32>
    %53 = vector.broadcast %52 : vector<1x1xf32> to vector<1x128xf32>
    %54 = arith.addf %51, %53 : vector<1x128xf32>
    %c0_22 = arith.constant 0 : index
    %c0_23 = arith.constant 0 : index
    %55 = vector.load %arg10[%c0_22, %c0_23] : memref<1x128xf32, #tpu.memory_space<vmem>>, vector<1x128xf32>
    tpu.vector_store %arg10[%c0_22, %c0_23], %54 {strides = array<i32>} : memref<1x128xf32, #tpu.memory_space<vmem>>, vector<1x128xf32>,
    return
  }
  func.func @transform_0(%arg0: i32) -> (i32, i32) {
    %c0_i32 = arith.constant 0 : i32
    %c0_i32_0 = arith.constant 0 : i32
    return %c0_i32, %arg0 : i32, i32
  }
  func.func @transform_1(%arg0: i32) -> (i32, i32) {
    %c0_i32 = arith.constant 0 : i32
    %c0_i32_0 = arith.constant 0 : i32
    %c0_i32_1 = arith.constant 0 : i32
    return %c0_i32, %c0_i32_0 : i32, i32
  }
  func.func @transform_2(%arg0: i32) -> (i32, i32) {
    %c0_i32 = arith.constant 0 : i32
    %c0_i32_0 = arith.constant 0 : i32
    %c0_i32_1 = arith.constant 0 : i32
    return %c0_i32, %c0_i32_0 : i32, i32
  }
  func.func @transform_3(%arg0: i32) -> (i32, i32) {
    %c0_i32 = arith.constant 0 : i32
    %c0_i32_0 = arith.constant 0 : i32
    %c0_i32_1 = arith.constant 0 : i32
    return %c0_i32, %c0_i32_0 : i32, i32
  }
  func.func @transform_4(%arg0: i32) -> (i32, i32) {
    %c0_i32 = arith.constant 0 : i32
    %c0_i32_0 = arith.constant 0 : i32
    %c0_i32_1 = arith.constant 0 : i32
    return %c0_i32, %c0_i32_0 : i32, i32
  }
  func.func @transform_5(%arg0: i32) -> (i32, i32) {
    %c0_i32 = arith.constant 0 : i32
    %c0_i32_0 = arith.constant 0 : i32
    %c0_i32_1 = arith.constant 0 : i32
    return %c0_i32, %c0_i32_0 : i32, i32
  }
  func.func @transform_6(%arg0: i32) -> (i32, i32) {
    %c0_i32 = arith.constant 0 : i32
    %c0_i32_0 = arith.constant 0 : i32
    %c0_i32_1 = arith.constant 0 : i32
    return %c0_i32, %c0_i32_0 : i32, i32
  }
  func.func @transform_7(%arg0: i32) -> (i32, i32) {
    %c0_i32 = arith.constant 0 : i32
    %c0_i32_0 = arith.constant 0 : i32
    %c0_i32_1 = arith.constant 0 : i32
    return %c0_i32, %c0_i32_0 : i32, i32
  }
  func.func @transform_8(%arg0: i32) -> (i32, i32) {
    %c0_i32 = arith.constant 0 : i32
    %c0_i32_0 = arith.constant 0 : i32
    %c0_i32_1 = arith.constant 0 : i32
    return %c0_i32, %c0_i32_0 : i32, i32
  }
  func.func @transform_9(%arg0: i32) -> (i32, i32) {
    %c0_i32 = arith.constant 0 : i32
    %c0_i32_0 = arith.constant 0 : i32
    return %c0_i32, %arg0 : i32, i32
  }
}

</mosaic_0001>

<llo_original>
// kernel: tpu_custom_call.1
$region0: #{tpu_custom_call.1}
  #allocation0 [shape = 'u32[]', space=smem, size = 0x4, offset = 0x4, fixed_abs, tag = 'smem constant byte address 0x4 - core index']
  #allocation1 [shape = 'u32[144,128]{1,0:T(1,128)}', space=vmem, size = 0x12000, scoped, tag = 'internal scratch']
  #allocation2 [shape = 'f32[1,1]{1,0:T(1,128)S(1)}', space=vmem, size = 0x200, scoped, tag = 'scoped memory for tpu_custom_call.1']
  %s0 = inlined_call_operand.vmem [shape: bf16[4,8], index: 0, kind: input, shape index: {}]
  %s1 = inlined_call_operand.vmem [shape: f32[64,4], index: 1, kind: input, shape index: {}]
  %s2 = inlined_call_operand.vmem [shape: f32[64,1], index: 2, kind: input, shape index: {}]
  %s3 = inlined_call_operand.vmem [shape: bf16[64,64], index: 3, kind: input, shape index: {}]
  %s4 = inlined_call_operand.vmem [shape: f32[64,1], index: 4, kind: input, shape index: {}]
  %s5 = inlined_call_operand.vmem [shape: bf16[64,64], index: 5, kind: input, shape index: {}]
  %s6 = inlined_call_operand.vmem [shape: f32[64,1], index: 6, kind: input, shape index: {}]
  %s7 = inlined_call_operand.vmem [shape: f32[64,1], index: 7, kind: input, shape index: {}]
  %s8 = inlined_call_operand.<no memory space> [shape: f32[1,1], index: 8, kind: input, shape index: {}]
  %s9 = inlined_call_operand.hbm [shape: f32[1,8], index: 9, kind: output, shape index: {}]
  %s10 = sld [smem:[#allocation0]]
  $region46: #{tpu_custom_call.1} parent=0
    _
  %s12 = ssub.s32 1, %s10
  %s13 = scalar_select 0, %s12, %s10
  %v14 = vstv %s8
  %15 = vst [vmem:[#allocation2] sm:$0x1] %v14
  $region1: #{tpu_custom_call.1} parent=0
    #allocation3 [shape = 'u8[512]{0}', space=vmem, size = 0x400, scoped, tag = 'output window, operand 0, single buffered']
    #allocation4 [shape = 's32[1]{0}', space=sflag, size = 0x4, scoped, tag = 'scoped memory for tpu_custom_call.1']
    %16 = vsyncpa [#allocation4], 0
    // Predicated region
    $region2: #{tpu_custom_call.1} parent=1 // pred_check
      _
    $region3: #{tpu_custom_call.1} parent=1 // pred_check_branch
      %18 = sbr.rel (0) target = $region5
    $region4: #{tpu_custom_call.1} parent=1 // pred_region
      _
    $region5: #{tpu_custom_call.1} parent=1 // pred_fallthru
      _
    // Predicated region
    $region6: #{tpu_custom_call.1} parent=1 // pred_check
      _
    $region7: #{tpu_custom_call.1} parent=1 // pred_check_branch
      %20 = sbr.rel (0) target = $region9
    $region8: #{tpu_custom_call.1} parent=1 // pred_region
      _
    $region9: #{tpu_custom_call.1} parent=1 // pred_fallthru
      _
    // Predicated region
    $region10: #{tpu_custom_call.1} parent=1 // pred_check
      _
    $region11: #{tpu_custom_call.1} parent=1 // pred_check_branch
      %22 = sbr.rel (0) target = $region13
    $region12: #{tpu_custom_call.1} parent=1 // pred_region
      _
    $region13: #{tpu_custom_call.1} parent=1 // pred_fallthru
      _
    // Predicated region
    $region14: #{tpu_custom_call.1} parent=1 // pred_check
      _
    $region15: #{tpu_custom_call.1} parent=1 // pred_check_branch
      %24 = sbr.rel (0) target = $region17
    $region16: #{tpu_custom_call.1} parent=1 // pred_region
      _
    $region17: #{tpu_custom_call.1} parent=1 // pred_fallthru
      _
    // Predicated region
    $region18: #{tpu_custom_call.1} parent=1 // pred_check
      _
    $region19: #{tpu_custom_call.1} parent=1 // pred_check_branch
      %26 = sbr.rel (0) target = $region21
    $region20: #{tpu_custom_call.1} parent=1 // pred_region
      _
    $region21: #{tpu_custom_call.1} parent=1 // pred_fallthru
      _
    // Predicated region
    $region22: #{tpu_custom_call.1} parent=1 // pred_check
      _
    $region23: #{tpu_custom_call.1} parent=1 // pred_check_branch
      %28 = sbr.rel (0) target = $region25
    $region24: #{tpu_custom_call.1} parent=1 // pred_region
      _
    $region25: #{tpu_custom_call.1} parent=1 // pred_fallthru
      _
    // Predicated region
    $region26: #{tpu_custom_call.1} parent=1 // pred_check
      _
    $region27: #{tpu_custom_call.1} parent=1 // pred_check_branch
      %30 = sbr.rel (0) target = $region29
    $region28: #{tpu_custom_call.1} parent=1 // pred_region
      _
    $region29: #{tpu_custom_call.1} parent=1 // pred_fallthru
      _
    // Predicated region
    $region30: #{tpu_custom_call.1} parent=1 // pred_check
      _
    $region31: #{tpu_custom_call.1} parent=1 // pred_check_branch
      %32 = sbr.rel (0) target = $region33
    $region32: #{tpu_custom_call.1} parent=1 // pred_region
      _
    $region33: #{tpu_custom_call.1} parent=1 // pred_fallthru
      _
    // Predicated region
    $region34: #{tpu_custom_call.1} parent=1 // pred_check
      _
    $region35: #{tpu_custom_call.1} parent=1 // pred_check_branch
      %34 = sbr.rel (0) target = $region37
    $region36: #{tpu_custom_call.1} parent=1 // pred_region
      _
    $region37: #{tpu_custom_call.1} parent=1 // pred_fallthru
      _
    %v36 = vld [vmem:[%s0] sm:$0x3]
    %v37 = vunpack.c.l.bf16 %v36
    %v38 = vld [vmem:[%s1] sm:$0xff]
    %v39 = vld [vmem:[%s1 + $0x8] sm:$0xff]
    %v40 = vld [vmem:[%s1 + $0x10] sm:$0xff]
    %v41 = vld [vmem:[%s1 + $0x18] sm:$0xff]
    %v42 = vld [vmem:[%s1 + $0x20] sm:$0xff]
    %v43 = vld [vmem:[%s1 + $0x28] sm:$0xff]
    %v44 = vld [vmem:[%s1 + $0x30] sm:$0xff]
    %v45 = vld [vmem:[%s1 + $0x38] sm:$0xff]
    %v46 = vld [vmem:[%s3] sm:$0xf]
    %v47 = vld [vmem:[%s3 + $0x4] sm:$0xf]
    %v48 = vld [vmem:[%s3 + $0x8] sm:$0xf]
    %v49 = vld [vmem:[%s3 + $0xc] sm:$0xf]
    %v50 = vld [vmem:[%s3 + $0x10] sm:$0xf]
    %v51 = vld [vmem:[%s3 + $0x14] sm:$0xf]
    %v52 = vld [vmem:[%s3 + $0x18] sm:$0xf]
    %v53 = vld [vmem:[%s3 + $0x1c] sm:$0xf]
    %v54 = vld [vmem:[%s5] sm:$0xf]
    %v55 = vld [vmem:[%s5 + $0x4] sm:$0xf]
    %v56 = vld [vmem:[%s5 + $0x8] sm:$0xf]
    %v57 = vld [vmem:[%s5 + $0xc] sm:$0xf]
    %v58 = vld [vmem:[%s5 + $0x10] sm:$0xf]
    %v59 = vld [vmem:[%s5 + $0x14] sm:$0xf]
    %v60 = vld [vmem:[%s5 + $0x18] sm:$0xf]
    %v61 = vld [vmem:[%s5 + $0x1c] sm:$0xf]
    %v62 = vld [vmem:[%s2] sm:$0xff]
    %v63 = vld [vmem:[%s2 + $0x8] sm:$0xff]
    %v64 = vld [vmem:[%s2 + $0x10] sm:$0xff]
    %v65 = vld [vmem:[%s2 + $0x18] sm:$0xff]
    %v66 = vld [vmem:[%s2 + $0x20] sm:$0xff]
    %v67 = vld [vmem:[%s2 + $0x28] sm:$0xff]
    %v68 = vld [vmem:[%s2 + $0x30] sm:$0xff]
    %v69 = vld [vmem:[%s2 + $0x38] sm:$0xff]
    %71 = vset.pattern.permute.xlu0 0
    %72 = vperm.xlu0 %71, %v38
    %v73 = vpop.permute.xlu0 %72
    %76 = vset.pattern.permute.xlu0 0
    %77 = vperm.xlu0 %76, %v39
    %v78 = vpop.permute.xlu0 %77
    %81 = vset.pattern.permute.xlu0 0
    %82 = vperm.xlu0 %81, %v40
    %v83 = vpop.permute.xlu0 %82
    %86 = vset.pattern.permute.xlu0 0
    %87 = vperm.xlu0 %86, %v41
    %v88 = vpop.permute.xlu0 %87
    %91 = vset.pattern.permute.xlu0 0
    %92 = vperm.xlu0 %91, %v42
    %v93 = vpop.permute.xlu0 %92
    %96 = vset.pattern.permute.xlu0 0
    %97 = vperm.xlu0 %96, %v43
    %v98 = vpop.permute.xlu0 %97
    %101 = vset.pattern.permute.xlu0 0
    %102 = vperm.xlu0 %101, %v44
    %v103 = vpop.permute.xlu0 %102
    %106 = vset.pattern.permute.xlu0 0
    %107 = vperm.xlu0 %106, %v45
    %v108 = vpop.permute.xlu0 %107
    %v110 = vlaneseq
    %v111 = vshrl.u32 %v110, 7
    %v112 = vsub.s32 0, %v111
    %v113 = vrot.slane %v37, %v112
    %v114 = vmul.f32 %v73, %v113
    %v115 = vmul.f32 %v78, %v113
    %v116 = vmul.f32 %v83, %v113
    %v117 = vmul.f32 %v88, %v113
    %v118 = vmul.f32 %v93, %v113
    %v119 = vmul.f32 %v98, %v113
    %v120 = vmul.f32 %v103, %v113
    %v121 = vmul.f32 %v108, %v113
    %123 = vset.pattern.permute.xlu0 0
    %124 = vperm.xlu0 %123, %v62
    %v125 = vpop.permute.xlu0 %124
    %128 = vset.pattern.permute.xlu0 0
    %129 = vperm.xlu0 %128, %v63
    %v130 = vpop.permute.xlu0 %129
    %133 = vset.pattern.permute.xlu0 0
    %134 = vperm.xlu0 %133, %v64
    %v135 = vpop.permute.xlu0 %134
    %138 = vset.pattern.permute.xlu0 0
    %139 = vperm.xlu0 %138, %v65
    %v140 = vpop.permute.xlu0 %139
    %143 = vset.pattern.permute.xlu0 0
    %144 = vperm.xlu0 %143, %v66
    %v145 = vpop.permute.xlu0 %144
    %148 = vset.pattern.permute.xlu0 0
    %149 = vperm.xlu0 %148, %v67
    %v150 = vpop.permute.xlu0 %149
    %153 = vset.pattern.permute.xlu0 0
    %154 = vperm.xlu0 %153, %v68
    %v155 = vpop.permute.xlu0 %154
    %158 = vset.pattern.permute.xlu0 0
    %159 = vperm.xlu0 %158, %v69
    %v160 = vpop.permute.xlu0 %159
    %v162 = vadd.f32 %v125, %v114
    %v163 = vadd.f32 %v130, %v115
    %v164 = vadd.f32 %v135, %v116
    %v165 = vadd.f32 %v140, %v117
    %v166 = vadd.f32 %v145, %v118
    %v167 = vadd.f32 %v150, %v119
    %v168 = vadd.f32 %v155, %v120
    %v169 = vadd.f32 %v160, %v121
    %170 = vset.pattern.permute.xlu0 1
    %171 = vperm.xlu0 %170, %v38
    %v172 = vpop.permute.xlu0 %171
    %174 = vset.pattern.permute.xlu0 1
    %175 = vperm.xlu0 %174, %v39
    %v176 = vpop.permute.xlu0 %175
    %178 = vset.pattern.permute.xlu0 1
    %179 = vperm.xlu0 %178, %v40
    %v180 = vpop.permute.xlu0 %179
    %182 = vset.pattern.permute.xlu0 1
    %183 = vperm.xlu0 %182, %v41
    %v184 = vpop.permute.xlu0 %183
    %186 = vset.pattern.permute.xlu0 1
    %187 = vperm.xlu0 %186, %v42
    %v188 = vpop.permute.xlu0 %187
    %190 = vset.pattern.permute.xlu0 1
    %191 = vperm.xlu0 %190, %v43
    %v192 = vpop.permute.xlu0 %191
    %194 = vset.pattern.permute.xlu0 1
    %195 = vperm.xlu0 %194, %v44
    %v196 = vpop.permute.xlu0 %195
    %198 = vset.pattern.permute.xlu0 1
    %199 = vperm.xlu0 %198, %v45
    %v200 = vpop.permute.xlu0 %199
    %v202 = vlaneseq
    %v203 = vshrl.u32 %v202, 7
    %v204 = vsub.s32 1, %v203
    %v205 = vrot.slane %v37, %v204
    %v206 = vmul.f32 %v172, %v205
    %v207 = vmul.f32 %v176, %v205
    %v208 = vmul.f32 %v180, %v205
    %v209 = vmul.f32 %v184, %v205
    %v210 = vmul.f32 %v188, %v205
    %v211 = vmul.f32 %v192, %v205
    %v212 = vmul.f32 %v196, %v205
    %v213 = vmul.f32 %v200, %v205
    %v214 = vadd.f32 %v162, %v206
    %v215 = vadd.f32 %v163, %v207
    %v216 = vadd.f32 %v164, %v208
    %v217 = vadd.f32 %v165, %v209
    %v218 = vadd.f32 %v166, %v210
    %v219 = vadd.f32 %v167, %v211
    %v220 = vadd.f32 %v168, %v212
    %v221 = vadd.f32 %v169, %v213
    %222 = vset.pattern.permute.xlu0 2
    %223 = vperm.xlu0 %222, %v38
    %v224 = vpop.permute.xlu0 %223
    %226 = vset.pattern.permute.xlu0 2
    %227 = vperm.xlu0 %226, %v39
    %v228 = vpop.permute.xlu0 %227
    %230 = vset.pattern.permute.xlu0 2
    %231 = vperm.xlu0 %230, %v40
    %v232 = vpop.permute.xlu0 %231
    %234 = vset.pattern.permute.xlu0 2
    %235 = vperm.xlu0 %234, %v41
    %v236 = vpop.permute.xlu0 %235
    %238 = vset.pattern.permute.xlu0 2
    %239 = vperm.xlu0 %238, %v42
    %v240 = vpop.permute.xlu0 %239
    %242 = vset.pattern.permute.xlu0 2
    %243 = vperm.xlu0 %242, %v43
    %v244 = vpop.permute.xlu0 %243
    %246 = vset.pattern.permute.xlu0 2
    %247 = vperm.xlu0 %246, %v44
    %v248 = vpop.permute.xlu0 %247
    %250 = vset.pattern.permute.xlu0 2
    %251 = vperm.xlu0 %250, %v45
    %v252 = vpop.permute.xlu0 %251
    %v254 = vlaneseq
    %v255 = vshrl.u32 %v254, 7
    %v256 = vsub.s32 2, %v255
    %v257 = vrot.slane %v37, %v256
    %v258 = vmul.f32 %v224, %v257
    %v259 = vmul.f32 %v228, %v257
    %v260 = vmul.f32 %v232, %v257
    %v261 = vmul.f32 %v236, %v257
    %v262 = vmul.f32 %v240, %v257
    %v263 = vmul.f32 %v244, %v257
    %v264 = vmul.f32 %v248, %v257
    %v265 = vmul.f32 %v252, %v257
    %v266 = vadd.f32 %v214, %v258
    %v267 = vadd.f32 %v215, %v259
    %v268 = vadd.f32 %v216, %v260
    %v269 = vadd.f32 %v217, %v261
    %v270 = vadd.f32 %v218, %v262
    %v271 = vadd.f32 %v219, %v263
    %v272 = vadd.f32 %v220, %v264
    %v273 = vadd.f32 %v221, %v265
    %274 = vset.pattern.permute.xlu0 3
    %275 = vperm.xlu0 %274, %v38
    %v276 = vpop.permute.xlu0 %275
    %278 = vset.pattern.permute.xlu0 3
    %279 = vperm.xlu0 %278, %v39
    %v280 = vpop.permute.xlu0 %279
    %282 = vset.pattern.permute.xlu0 3
    %283 = vperm.xlu0 %282, %v40
    %v284 = vpop.permute.xlu0 %283
    %286 = vset.pattern.permute.xlu0 3
    %287 = vperm.xlu0 %286, %v41
    %v288 = vpop.permute.xlu0 %287
    %290 = vset.pattern.permute.xlu0 3
    %291 = vperm.xlu0 %290, %v42
    %v292 = vpop.permute.xlu0 %291
    %294 = vset.pattern.permute.xlu0 3
    %295 = vperm.xlu0 %294, %v43
    %v296 = vpop.permute.xlu0 %295
    %298 = vset.pattern.permute.xlu0 3
    %299 = vperm.xlu0 %298, %v44
    %v300 = vpop.permute.xlu0 %299
    %302 = vset.pattern.permute.xlu0 3
    %303 = vperm.xlu0 %302, %v45
    %v304 = vpop.permute.xlu0 %303
    %v306 = vlaneseq
    %v307 = vshrl.u32 %v306, 7
    %v308 = vsub.s32 3, %v307
    %v309 = vrot.slane %v37, %v308
    %v310 = vmul.f32 %v276, %v309
    %v311 = vmul.f32 %v280, %v309
    %v312 = vmul.f32 %v284, %v309
    %v313 = vmul.f32 %v288, %v309
    %v314 = vmul.f32 %v292, %v309
    %v315 = vmul.f32 %v296, %v309
    %v316 = vmul.f32 %v300, %v309
    %v317 = vmul.f32 %v304, %v309
    %v318 = vadd.f32 %v266, %v310
    %v319 = vadd.f32 %v267, %v311
    %v320 = vadd.f32 %v268, %v312
    %v321 = vadd.f32 %v269, %v313
    %v322 = vadd.f32 %v270, %v314
    %v323 = vadd.f32 %v271, %v315
    %v324 = vadd.f32 %v272, %v316
    %v325 = vadd.f32 %v273, %v317
    %v326 = vmax.f32 %v318, 0.0
    %v327 = vmax.f32 %v319, 0.0
    %v328 = vmax.f32 %v320, 0.0
    %v329 = vmax.f32 %v321, 0.0
    %v330 = vmax.f32 %v322, 0.0
    %v331 = vmax.f32 %v323, 0.0
    %v332 = vmax.f32 %v324, 0.0
    %v333 = vmax.f32 %v325, 0.0
    %v334 = vpack.c.bf16 %v327, %v326
    %v335 = vpack.c.bf16 %v329, %v328
    %v336 = vpack.c.bf16 %v331, %v330
    %v337 = vpack.c.bf16 %v333, %v332
    %v338 = vld [vmem:[%s4] sm:$0xff]
    %v339 = vld [vmem:[%s4 + $0x8] sm:$0xff]
    %v340 = vld [vmem:[%s4 + $0x10] sm:$0xff]
    %v341 = vld [vmem:[%s4 + $0x18] sm:$0xff]
    %v342 = vld [vmem:[%s4 + $0x20] sm:$0xff]
    %v343 = vld [vmem:[%s4 + $0x28] sm:$0xff]
    %v344 = vld [vmem:[%s4 + $0x30] sm:$0xff]
    %v345 = vld [vmem:[%s4 + $0x38] sm:$0xff]
    %347 = vset.pattern.permute.xlu0 0
    %348 = vperm.xlu0 %347, %v338
    %v349 = vpop.permute.xlu0 %348
    %352 = vset.pattern.permute.xlu0 0
    %353 = vperm.xlu0 %352, %v339
    %v354 = vpop.permute.xlu0 %353
    %357 = vset.pattern.permute.xlu0 0
    %358 = vperm.xlu0 %357, %v340
    %v359 = vpop.permute.xlu0 %358
    %362 = vset.pattern.permute.xlu0 0
    %363 = vperm.xlu0 %362, %v341
    %v364 = vpop.permute.xlu0 %363
    %367 = vset.pattern.permute.xlu0 0
    %368 = vperm.xlu0 %367, %v342
    %v369 = vpop.permute.xlu0 %368
    %372 = vset.pattern.permute.xlu0 0
    %373 = vperm.xlu0 %372, %v343
    %v374 = vpop.permute.xlu0 %373
    %377 = vset.pattern.permute.xlu0 0
    %378 = vperm.xlu0 %377, %v344
    %v379 = vpop.permute.xlu0 %378
    %382 = vset.pattern.permute.xlu0 0
    %383 = vperm.xlu0 %382, %v345
    %v384 = vpop.permute.xlu0 %383
    %v394 = vunpack.c.l.b16 %v46
    %v395 = vunpack.c.l.b16 %v47
    %v396 = vunpack.c.l.b16 %v48
    %v397 = vunpack.c.l.b16 %v49
    %v398 = vunpack.c.l.b16 %v50
    %v399 = vunpack.c.l.b16 %v51
    %v400 = vunpack.c.l.b16 %v52
    %v401 = vunpack.c.l.b16 %v53
    %v402 = vpack.c.b16 %v395, %v394
    %v403 = vpack.c.b16 %v397, %v396
    %v404 = vpack.c.b16 %v399, %v398
    %v405 = vpack.c.b16 %v401, %v400
    %vm406 = vcmask 523264
    %v408 = vsel %vm406, %v402, 0
    %v411 = vsel %vm406, %v403, 0
    %v414 = vsel %vm406, %v404, 0
    %v417 = vsel %vm406, %v405, 0
    %419 = vmatprep.subr.bf16.mxu0 0
    %420 = vmatpush1.bf16.msra.mxu0 %v334
    %421 = vmatprep.subr.bf16.mxu0 0
    %422 = vmatpush1.bf16.msra.mxu0 %v335
    %423 = vmatprep.subr.bf16.mxu0 0
    %424 = vmatpush1.bf16.msra.mxu0 %v336
    %425 = vmatprep.subr.bf16.mxu0 0
    %426 = vmatpush1.bf16.msra.mxu0 %v337
    %427 = vmatprep.subr.bf16.mxu0 0
    %428 = vmatpush1.bf16.msra.mxu0 0
    %429 = vmatprep.subr.bf16.mxu0 0
    %430 = vmatpush1.bf16.msra.mxu0 0
    %431 = vmatprep.subr.bf16.mxu0 0
    %432 = vmatpush1.bf16.msra.mxu0 0
    %433 = vmatprep.subr.bf16.mxu0 0
    %434 = vmatpush1.bf16.msra.mxu0 0
    %435 = vmatprep.subr.bf16.mxu0 0
    %436 = vmatpush1.bf16.msra.mxu0 0
    %437 = vmatprep.subr.bf16.mxu0 0
    %438 = vmatpush1.bf16.msra.mxu0 0
    %439 = vmatprep.subr.bf16.mxu0 0
    %440 = vmatpush1.bf16.msra.mxu0 0
    %441 = vmatprep.subr.bf16.mxu0 0
    %442 = vmatpush1.bf16.msra.mxu0 0
    %443 = vmatprep.subr.bf16.mxu0 0
    %444 = vmatpush1.bf16.msra.mxu0 0
    %445 = vmatprep.subr.bf16.mxu0 0
    %446 = vmatpush1.bf16.msra.mxu0 0
    %447 = vmatprep.subr.bf16.mxu0 0
    %448 = vmatpush1.bf16.msra.mxu0 0
    %449 = vmatprep.subr.bf16.mxu0 0
    %450 = vmatpush1.bf16.msra.mxu0 0
    %451 = vmatprep.mubr.bf16.mxu0 0
    %452 = vmatmul.mubr.bf16.gmra.mrb[0].mxu0 %v408
    %v453 = vpop.f32.mrb[0].mxu0
    %v454 = vadd.f32 %v349, %v453
    %v455 = vpop.f32.mrb[0].mxu0
    %v456 = vpop.f32.mrb[0].mxu0
    %v457 = vadd.f32 %v354, %v456
    %v458 = vpop.f32.mrb[0].mxu0
    %459 = vmatprep.mubr.bf16.mxu0 0
    %460 = vmatmul.mubr.bf16.gmra.mrb[0].mxu0 %v411
    %v461 = vpop.f32.mrb[0].mxu0
    %v462 = vadd.f32 %v359, %v461
    %v463 = vpop.f32.mrb[0].mxu0
    %v464 = vpop.f32.mrb[0].mxu0
    %v465 = vadd.f32 %v364, %v464
    %v466 = vpop.f32.mrb[0].mxu0
    %467 = vmatprep.mubr.bf16.mxu0 0
    %468 = vmatmul.mubr.bf16.gmra.mrb[0].mxu0 %v414
    %v469 = vpop.f32.mrb[0].mxu0
    %v470 = vadd.f32 %v369, %v469
    %v471 = vpop.f32.mrb[0].mxu0
    %v472 = vpop.f32.mrb[0].mxu0
    %v473 = vadd.f32 %v374, %v472
    %v474 = vpop.f32.mrb[0].mxu0
    %475 = vmatprep.mubr.bf16.mxu0 0
    %476 = vmatmul.mubr.bf16.gmra.mrb[0].mxu0 %v417
    %v477 = vpop.f32.mrb[0].mxu0
    %v478 = vadd.f32 %v379, %v477
    %v479 = vpop.f32.mrb[0].mxu0
    %v480 = vpop.f32.mrb[0].mxu0
    %v481 = vadd.f32 %v384, %v480
    %v482 = vpop.f32.mrb[0].mxu0
    %483 = vdwg.mxu0
    %v484 = vmax.f32 %v454, 0.0
    %v485 = vmax.f32 %v457, 0.0
    %v486 = vmax.f32 %v462, 0.0
    %v487 = vmax.f32 %v465, 0.0
    %v488 = vmax.f32 %v470, 0.0
    %v489 = vmax.f32 %v473, 0.0
    %v490 = vmax.f32 %v478, 0.0
    %v491 = vmax.f32 %v481, 0.0
    %v492 = vpack.c.bf16 %v485, %v484
    %v493 = vpack.c.bf16 %v487, %v486
    %v494 = vpack.c.bf16 %v489, %v488
    %v495 = vpack.c.bf16 %v491, %v490
    %v496 = vld [vmem:[%s6] sm:$0xff]
    %v497 = vld [vmem:[%s6 + $0x8] sm:$0xff]
    %v498 = vld [vmem:[%s6 + $0x10] sm:$0xff]
    %v499 = vld [vmem:[%s6 + $0x18] sm:$0xff]
    %v500 = vld [vmem:[%s6 + $0x20] sm:$0xff]
    %v501 = vld [vmem:[%s6 + $0x28] sm:$0xff]
    %v502 = vld [vmem:[%s6 + $0x30] sm:$0xff]
    %v503 = vld [vmem:[%s6 + $0x38] sm:$0xff]
    %505 = vset.pattern.permute.xlu0 0
    %506 = vperm.xlu0 %505, %v496
    %v507 = vpop.permute.xlu0 %506
    %510 = vset.pattern.permute.xlu0 0
    %511 = vperm.xlu0 %510, %v497
    %v512 = vpop.permute.xlu0 %511
    %515 = vset.pattern.permute.xlu0 0
    %516 = vperm.xlu0 %515, %v498
    %v517 = vpop.permute.xlu0 %516
    %520 = vset.pattern.permute.xlu0 0
    %521 = vperm.xlu0 %520, %v499
    %v522 = vpop.permute.xlu0 %521
    %525 = vset.pattern.permute.xlu0 0
    %526 = vperm.xlu0 %525, %v500
    %v527 = vpop.permute.xlu0 %526
    %530 = vset.pattern.permute.xlu0 0
    %531 = vperm.xlu0 %530, %v501
    %v532 = vpop.permute.xlu0 %531
    %535 = vset.pattern.permute.xlu0 0
    %536 = vperm.xlu0 %535, %v502
    %v537 = vpop.permute.xlu0 %536
    %540 = vset.pattern.permute.xlu0 0
    %541 = vperm.xlu0 %540, %v503
    %v542 = vpop.permute.xlu0 %541
    %v552 = vunpack.c.l.b16 %v54
    %v553 = vunpack.c.l.b16 %v55
    %v554 = vunpack.c.l.b16 %v56
    %v555 = vunpack.c.l.b16 %v57
    %v556 = vunpack.c.l.b16 %v58
    %v557 = vunpack.c.l.b16 %v59
    %v558 = vunpack.c.l.b16 %v60
    %v559 = vunpack.c.l.b16 %v61
    %v560 = vpack.c.b16 %v553, %v552
    %v561 = vpack.c.b16 %v555, %v554
    %v562 = vpack.c.b16 %v557, %v556
    %v563 = vpack.c.b16 %v559, %v558
    %v565 = vsel %vm406, %v560, 0
    %v568 = vsel %vm406, %v561, 0
    %v571 = vsel %vm406, %v562, 0
    %v574 = vsel %vm406, %v563, 0
    %576 = vmatprep.subr.bf16.mxu0 0
    %577 = vmatpush1.bf16.msra.mxu0 %v492
    %578 = vmatprep.subr.bf16.mxu0 0
    %579 = vmatpush1.bf16.msra.mxu0 %v493
    %580 = vmatprep.subr.bf16.mxu0 0
    %581 = vmatpush1.bf16.msra.mxu0 %v494
    %582 = vmatprep.subr.bf16.mxu0 0
    %583 = vmatpush1.bf16.msra.mxu0 %v495
    %584 = vmatprep.subr.bf16.mxu0 0
    %585 = vmatpush1.bf16.msra.mxu0 0
    %586 = vmatprep.subr.bf16.mxu0 0
    %587 = vmatpush1.bf16.msra.mxu0 0
    %588 = vmatprep.subr.bf16.mxu0 0
    %589 = vmatpush1.bf16.msra.mxu0 0
    %590 = vmatprep.subr.bf16.mxu0 0
    %591 = vmatpush1.bf16.msra.mxu0 0
    %592 = vmatprep.subr.bf16.mxu0 0
    %593 = vmatpush1.bf16.msra.mxu0 0
    %594 = vmatprep.subr.bf16.mxu0 0
    %595 = vmatpush1.bf16.msra.mxu0 0
    %596 = vmatprep.subr.bf16.mxu0 0
    %597 = vmatpush1.bf16.msra.mxu0 0
    %598 = vmatprep.subr.bf16.mxu0 0
    %599 = vmatpush1.bf16.msra.mxu0 0
    %600 = vmatprep.subr.bf16.mxu0 0
    %601 = vmatpush1.bf16.msra.mxu0 0
    %602 = vmatprep.subr.bf16.mxu0 0
    %603 = vmatpush1.bf16.msra.mxu0 0
    %604 = vmatprep.subr.bf16.mxu0 0
    %605 = vmatpush1.bf16.msra.mxu0 0
    %606 = vmatprep.subr.bf16.mxu0 0
    %607 = vmatpush1.bf16.msra.mxu0 0
    %608 = vmatprep.mubr.bf16.mxu0 0
    %609 = vmatmul.mubr.bf16.gmra.mrb[0].mxu0 %v565
    %v610 = vpop.f32.mrb[0].mxu0
    %v611 = vadd.f32 %v507, %v610
    %v612 = vpop.f32.mrb[0].mxu0
    %v613 = vpop.f32.mrb[0].mxu0
    %v614 = vadd.f32 %v512, %v613
    %v615 = vpop.f32.mrb[0].mxu0
    %616 = vmatprep.mubr.bf16.mxu0 0
    %617 = vmatmul.mubr.bf16.gmra.mrb[0].mxu0 %v568
    %v618 = vpop.f32.mrb[0].mxu0
    %v619 = vadd.f32 %v517, %v618
    %v620 = vpop.f32.mrb[0].mxu0
    %v621 = vpop.f32.mrb[0].mxu0
    %v622 = vadd.f32 %v522, %v621
    %v623 = vpop.f32.mrb[0].mxu0
    %624 = vmatprep.mubr.bf16.mxu0 0
    %625 = vmatmul.mubr.bf16.gmra.mrb[0].mxu0 %v571
    %v626 = vpop.f32.mrb[0].mxu0
    %v627 = vadd.f32 %v527, %v626
    %v628 = vpop.f32.mrb[0].mxu0
    %v629 = vpop.f32.mrb[0].mxu0
    %v630 = vadd.f32 %v532, %v629
    %v631 = vpop.f32.mrb[0].mxu0
    %632 = vmatprep.mubr.bf16.mxu0 0
    %633 = vmatmul.mubr.bf16.gmra.mrb[0].mxu0 %v574
    %v634 = vpop.f32.mrb[0].mxu0
    %v635 = vadd.f32 %v537, %v634
    %v636 = vpop.f32.mrb[0].mxu0
    %v637 = vpop.f32.mrb[0].mxu0
    %v638 = vadd.f32 %v542, %v637
    %v639 = vpop.f32.mrb[0].mxu0
    %640 = vdwg.mxu0
    %v641 = vmax.f32 %v611, 0.0
    %v642 = vmax.f32 %v614, 0.0
    %v643 = vmax.f32 %v619, 0.0
    %v644 = vmax.f32 %v622, 0.0
    %v645 = vmax.f32 %v627, 0.0
    %v646 = vmax.f32 %v630, 0.0
    %v647 = vmax.f32 %v635, 0.0
    %v648 = vmax.f32 %v638, 0.0
    %v649 = vld [vmem:[%s7] sm:$0xff]
    %v650 = vld [vmem:[%s7 + $0x8] sm:$0xff]
    %v651 = vld [vmem:[%s7 + $0x10] sm:$0xff]
    %v652 = vld [vmem:[%s7 + $0x18] sm:$0xff]
    %v653 = vld [vmem:[%s7 + $0x20] sm:$0xff]
    %v654 = vld [vmem:[%s7 + $0x28] sm:$0xff]
    %v655 = vld [vmem:[%s7 + $0x30] sm:$0xff]
    %v656 = vld [vmem:[%s7 + $0x38] sm:$0xff]
    %658 = vset.pattern.permute.xlu0 0
    %659 = vperm.xlu0 %658, %v649
    %v660 = vpop.permute.xlu0 %659
    %663 = vset.pattern.permute.xlu0 0
    %664 = vperm.xlu0 %663, %v650
    %v665 = vpop.permute.xlu0 %664
    %668 = vset.pattern.permute.xlu0 0
    %669 = vperm.xlu0 %668, %v651
    %v670 = vpop.permute.xlu0 %669
    %673 = vset.pattern.permute.xlu0 0
    %674 = vperm.xlu0 %673, %v652
    %v675 = vpop.permute.xlu0 %674
    %678 = vset.pattern.permute.xlu0 0
    %679 = vperm.xlu0 %678, %v653
    %v680 = vpop.permute.xlu0 %679
    %683 = vset.pattern.permute.xlu0 0
    %684 = vperm.xlu0 %683, %v654
    %v685 = vpop.permute.xlu0 %684
    %688 = vset.pattern.permute.xlu0 0
    %689 = vperm.xlu0 %688, %v655
    %v690 = vpop.permute.xlu0 %689
    %693 = vset.pattern.permute.xlu0 0
    %694 = vperm.xlu0 %693, %v656
    %v695 = vpop.permute.xlu0 %694
    %v697 = vmul.f32 %v641, %v660
    %v698 = vmul.f32 %v642, %v665
    %v699 = vmul.f32 %v643, %v670
    %v700 = vmul.f32 %v644, %v675
    %v701 = vmul.f32 %v645, %v680
    %v702 = vmul.f32 %v646, %v685
    %v703 = vmul.f32 %v647, %v690
    %v704 = vmul.f32 %v648, %v695
    %v705 = vadd.f32 %v697, %v698
    %v706 = vadd.f32 %v705, %v699
    %v707 = vadd.f32 %v706, %v700
    %v708 = vadd.f32 %v707, %v701
    %v709 = vadd.f32 %v708, %v702
    %v710 = vadd.f32 %v709, %v703
    %v711 = vadd.f32 %v710, %v704
    %v712 = vrot.slane %v711, 4
    %v713 = vadd.f32 %v711, %v712
    %v714 = vrot.slane %v713, 2
    %v715 = vadd.f32 %v713, %v714
    %v716 = vrot.slane %v715, 1
    %v717 = vadd.f32 %v715, %v716
    %v718 = vld [vmem:[#allocation2] sm:$0x1]
    %720 = vset.pattern.permute.xlu0 0
    %721 = vperm.xlu0 %720, %v718
    %v722 = vpop.permute.xlu0 %721
    %v724 = vlaneseq
    %v725 = vshrl.u32 %v724, 7
    %v726 = vsub.s32 0, %v725
    %v727 = vrot.slane %v722, %v726
    %v728 = vadd.f32 %v717, %v727
    %729 = vst [vmem:[#allocation3] sm:$0x1] %v728
    // Predicated region
    $region38: #{tpu_custom_call.1} parent=1 // pred_check
      _
    $region39: #{tpu_custom_call.1} parent=1 // pred_check_branch
      %731 = sbr.rel (0) target = $region41
    $region40: #{tpu_custom_call.1} parent=1 // pred_region
      %s733 = ssub.s32 16, 16
      %734 = vsyncadd [#allocation4], %s733
      %s736 = sshll.u32 [#allocation3], 4
      %s737 = int_to_ptr.vmem [resolvable:$true] %s736
      %739 = dma.vmem_to_hbm [thread:$0]  %s737, 16, %s9, [#allocation4]
    $region41: #{tpu_custom_call.1} parent=1 // pred_fallthru
      _
    // Predicated region
    $region42: #{tpu_custom_call.1} parent=1 // pred_check
      _
    $region43: #{tpu_custom_call.1} parent=1 // pred_check_branch
      %741 = sbr.rel (0) target = $region45
    $region44: #{tpu_custom_call.1} parent=1 // pred_region
      %742 = dma.done [#allocation4], 16
    $region45: #{tpu_custom_call.1} parent=1 // pred_fallthru
      _
    %743 = vsyncpa [#allocation4], 1

</llo_original>
